<compile_context>
chip_gen: v7x
topology: tpu7x:2x2x1
jax: 0.10.0
libtpu: 0.0.40
codegen_flags: <defaults>
</compile_context>

<pallas_src>
import jax
import jax.numpy as jnp
from jax.experimental import pallas as pl
from jax.experimental.pallas import tpu as pltpu

LN_EPS = 1e-5
LANE = 128
SUBLANE = 8
HID1, HID2, HID3 = 128, 256, 128


def _round_up(n, m):
    return ((n + m - 1) // m) * m


def _pad_to(a, shape):
    pads = [(0, s - d) for d, s in zip(a.shape, shape)]
    return jnp.pad(a, pads)


def _layernorm(h, gamma, beta):
    # PyTorch LayerNorm semantics (biased variance, eps inside rsqrt) with
    # one-pass stats and gamma folded into the normalizer:
    #   scale = rsqrt(var+eps) * gamma ; shift = beta - mean*scale
    mean = jnp.mean(h, axis=-1, keepdims=True)
    mean_sq = jnp.mean(h * h, axis=-1, keepdims=True)
    var = mean_sq - mean * mean
    inv = jax.lax.rsqrt(var + LN_EPS)
    scale = inv * gamma
    shift = beta - mean * scale
    return h * scale + shift


def dqn_kernel(x_ref, w1_ref, w2_ref, w3_ref, w4_ref, v128_ref, v256_ref, out_ref):
    tb, sd = x_ref.shape

    # Lane-pad the (tb, sd) f32 input tile to 128 lanes inside VMEM (w1's padded
    # rows are zero, so the extra lanes contribute nothing), then cast to bf16.
    x = x_ref[...]
    if sd < LANE:
        x = jnp.concatenate([x, jnp.zeros((tb, LANE - sd), jnp.float32)], axis=-1)
    x = x.astype(jnp.bfloat16)

    # Resident packed vectors: rows of the two slabs.
    b1 = v128_ref[0:1, :]
    g1 = v128_ref[1:2, :]
    be1 = v128_ref[2:3, :]
    b3 = v128_ref[3:4, :]
    b4 = v128_ref[4:5, :]
    b2 = v256_ref[0:1, :]
    g2 = v256_ref[1:2, :]
    be2 = v256_ref[2:3, :]

    # fc1 -> ln1 -> relu   (dropout1: identity in eval mode)
    h = jnp.dot(x, w1_ref[...], preferred_element_type=jnp.float32) + b1
    h = jnp.maximum(_layernorm(h, g1, be1), 0.0)

    # fc2 -> ln2 -> relu   (dropout2: identity in eval mode)
    h = jnp.dot(h.astype(jnp.bfloat16), w2_ref[...],
                preferred_element_type=jnp.float32) + b2
    h = jnp.maximum(_layernorm(h, g2, be2), 0.0)

    # fc3 -> relu
    h = jnp.dot(h.astype(jnp.bfloat16), w3_ref[...],
                preferred_element_type=jnp.float32) + b3
    h = jnp.maximum(h, 0.0)

    # fc4 (Q values); store only the real action_dim lanes (narrow f32 store).
    q = jnp.dot(h.astype(jnp.bfloat16), w4_ref[...],
                preferred_element_type=jnp.float32) + b4
    out_ref[...] = q[:, : out_ref.shape[1]]


def prepare_params(params):
    """One-time prep: pad odd dims to MXU-friendly shapes, cast matmul weights
    to bf16, pack small vectors into two resident slabs. Call once at init."""
    sd = params["w1"].shape[0]
    ad = params["w4"].shape[1]
    sd_p = _round_up(sd, LANE)
    ad_p = _round_up(ad, LANE)

    def row(v, n):
        v = jnp.asarray(v, jnp.float32).reshape(1, -1)
        return _pad_to(v, (1, n))

    v128 = jnp.concatenate(
        [row(params["b1"], HID1), row(params["g1"], HID1), row(params["be1"], HID1),
         row(params["b3"], HID3), row(params["b4"], ad_p)], axis=0)   # (5, 128)
    v256 = jnp.concatenate(
        [row(params["b2"], HID2), row(params["g2"], HID2), row(params["be2"], HID2)],
        axis=0)                                                       # (3, 256)

    prepared = {
        "w1": _pad_to(params["w1"].astype(jnp.bfloat16), (sd_p, HID1)),
        "w2": params["w2"].astype(jnp.bfloat16),
        "w3": params["w3"].astype(jnp.bfloat16),
        "w4": _pad_to(params["w4"].astype(jnp.bfloat16), (HID3, ad_p)),
        "v128": v128,
        "v256": v256,
    }
    meta = {"state_dim": sd, "action_dim": ad, "sd_p": sd_p, "ad_p": ad_p}
    return jax.device_put(prepared), meta


def _choose_batch_tiling(B, block_b):
    """Pick (tile_rows, num_tiles): minimize padded rows, keep >=2 tiles when the
    batch is big enough so the 'parallel' axis shards across v7x's two TCs."""
    ntiles = pl.cdiv(B, block_b)
    if ntiles == 1:
        if B <= SUBLANE:
            return B, 1          # block == full array dim: exact, no OOB rows
        ntiles = 2               # megacore split (no-op on single-TC v5e/v6e)
    tb = _round_up(pl.cdiv(B, ntiles), SUBLANE)
    ntiles = pl.cdiv(B, tb)
    return tb, ntiles


def dqn_forward(x, prepared, action_dim, *, training=False, block_b=512):
    """x: [B, state_dim] f32 (unpadded). prepared: output of prepare_params."""
    assert not training, (
        "TODO(synk): training-mode dropout (p=0.3) not implemented; eval-mode only."
    )
    B, sd = x.shape
    sd_p, ad_p = prepared["w1"].shape[0], prepared["w4"].shape[1]
    assert sd <= sd_p

    tb, ntiles = _choose_batch_tiling(B, block_b)

    def resident(shape):
        # Same block every grid step -> stays VMEM-resident (no re-DMA).
        return pl.BlockSpec(shape, lambda i: (0,) * len(shape))

    in_specs = [
        pl.BlockSpec((tb, sd), lambda i: (i, 0)),            # x, batch-tiled, unpadded
        resident(prepared["w1"].shape),
        resident(prepared["w2"].shape),
        resident(prepared["w3"].shape),
        resident(prepared["w4"].shape),
        resident(prepared["v128"].shape),
        resident(prepared["v256"].shape),
    ]
    out_specs = pl.BlockSpec((tb, action_dim), lambda i: (i, 0))

    weight_bytes = sum(int(v.size) * v.dtype.itemsize for v in prepared.values())
    flops = 2 * B * (sd_p * HID1 + HID1 * HID2 + HID2 * HID3 + HID3 * ad_p)
    bytes_accessed = B * sd * 4 + B * action_dim * 4 + weight_bytes
    cost = pl.CostEstimate(
        flops=flops,
        transcendentals=2 * B,          # one rsqrt per row per LayerNorm
        bytes_accessed=bytes_accessed,
    )

    out = pl.pallas_call(
        dqn_kernel,
        out_shape=jax.ShapeDtypeStruct((B, action_dim), jnp.float32),
        grid_spec=pltpu.PrefetchScalarGridSpec(
            num_scalar_prefetch=0,
            grid=(ntiles,),
            in_specs=in_specs,
            out_specs=out_specs,
        ),
        compiler_params=pltpu.CompilerParams(
            dimension_semantics=("parallel",),
        ),
        cost_estimate=cost,
    )(
        x.astype(jnp.float32),
        prepared["w1"], prepared["w2"], prepared["w3"], prepared["w4"],
        prepared["v128"], prepared["v256"],
    )
    return out


def init_params(key, state_dim, action_dim):
    """Deterministic init mimicking PyTorch nn.Linear default (uniform ±1/sqrt(fan_in))
    and nn.LayerNorm default (gamma=1, beta=0). Weights stored [in, out]."""
    dims = [(state_dim, HID1), (HID1, HID2), (HID2, HID3), (HID3, action_dim)]
    params = {}
    keys = jax.random.split(key, 2 * len(dims))
    for i, (fan_in, fan_out) in enumerate(dims):
        bound = 1.0 / jnp.sqrt(jnp.float32(fan_in))
        params[f"w{i + 1}"] = jax.random.uniform(
            keys[2 * i], (fan_in, fan_out), minval=-bound, maxval=bound,
            dtype=jnp.float32)
        params[f"b{i + 1}"] = jax.random.uniform(
            keys[2 * i + 1], (1, fan_out), minval=-bound, maxval=bound,
            dtype=jnp.float32)
    params["g1"] = jnp.ones((1, HID1), jnp.float32)
    params["be1"] = jnp.zeros((1, HID1), jnp.float32)
    params["g2"] = jnp.ones((1, HID2), jnp.float32)
    params["be2"] = jnp.zeros((1, HID2), jnp.float32)
    return params


def reference_forward(x, params):
    """Pure-JAX reference matching the kernel numerics (bf16 matmul operands,
    f32 accumulation, f32 LayerNorm/ReLU)."""
    def mm(a, w):
        return jnp.dot(a.astype(jnp.bfloat16), w.astype(jnp.bfloat16),
                       preferred_element_type=jnp.float32)

    h = mm(x, params["w1"]) + params["b1"]
    h = jnp.maximum(_layernorm(h, params["g1"], params["be1"]), 0.0)
    h = mm(h, params["w2"]) + params["b2"]
    h = jnp.maximum(_layernorm(h, params["g2"], params["be2"]), 0.0)
    h = jnp.maximum(mm(h, params["w3"]) + params["b3"], 0.0)
    return mm(h, params["w4"]) + params["b4"]


if __name__ == "__main__":
    # num_assets = 4  =>  state_dim = 4 + 1 + 4*2 = 13 ; action_dim = 21
    num_assets = 4
    state_dim = num_assets + 1 + num_assets * 2
    action_dim = 21
    batch = 2

    key = jax.random.PRNGKey(0)
    pkey, xkey = jax.random.split(key)
    params = init_params(pkey, state_dim, action_dim)
    x = jax.random.normal(xkey, (batch, state_dim), dtype=jnp.float32)

    # One-time weight prep (padding/bf16 cast/slab packing) — hoisted out of the
    # per-call path.
    prepared, meta = prepare_params(params)

    forward = jax.jit(lambda xb: dqn_forward(xb, prepared, action_dim))
    q_vals = jax.block_until_ready(forward(x))

    ref = reference_forward(x, params)
    assert q_vals.shape == (batch, action_dim)
    assert jnp.allclose(q_vals, ref, atol=5e-3, rtol=5e-3), "mismatch vs reference"

    print("KERNEL_OK")
</pallas_src>

<mosaic_0001>
module attributes {stable_mosaic.version = 11 : i64} {
  func.func @dqn_kernel(%arg0: i32, %arg1: memref<2x13xf32, #tpu.memory_space<vmem>>, %arg2: memref<128x128xbf16, #tpu.memory_space<vmem>>, %arg3: memref<128x256xbf16, #tpu.memory_space<vmem>>, %arg4: memref<256x128xbf16, #tpu.memory_space<vmem>>, %arg5: memref<128x128xbf16, #tpu.memory_space<vmem>>, %arg6: memref<5x128xf32, #tpu.memory_space<vmem>>, %arg7: memref<3x256xf32, #tpu.memory_space<vmem>>, %arg8: memref<2x21xf32, #tpu.memory_space<vmem>>) attributes {dimension_semantics = [#tpu.dimension_semantics<parallel>], iteration_bounds = array<i64: 1>, scalar_prefetch = 0 : i64, scratch_operands = 0 : i64, tpu.core_type = #tpu.core_type<tc>, window_params = [{transform_indices = @transform_0, window_bounds = array<i64: 2, 13>}, {pipeline_mode = #tpu.pipeline_mode<synchronous>, transform_indices = @transform_1, window_bounds = array<i64: 128, 128>}, {pipeline_mode = #tpu.pipeline_mode<synchronous>, transform_indices = @transform_2, window_bounds = array<i64: 128, 256>}, {pipeline_mode = #tpu.pipeline_mode<synchronous>, transform_indices = @transform_3, window_bounds = array<i64: 256, 128>}, {pipeline_mode = #tpu.pipeline_mode<synchronous>, transform_indices = @transform_4, window_bounds = array<i64: 128, 128>}, {pipeline_mode = #tpu.pipeline_mode<synchronous>, transform_indices = @transform_5, window_bounds = array<i64: 5, 128>}, {pipeline_mode = #tpu.pipeline_mode<synchronous>, transform_indices = @transform_6, window_bounds = array<i64: 3, 256>}, {transform_indices = @transform_7, window_bounds = array<i64: 2, 21>}]} {
    %c0 = arith.constant 0 : index
    %c0_0 = arith.constant 0 : index
    %0 = vector.load %arg1[%c0, %c0_0] : memref<2x13xf32, #tpu.memory_space<vmem>>, vector<2x13xf32>
    %cst = arith.constant 0.000000e+00 : f32
    %1 = vector.broadcast %cst : f32 to vector<2x115xf32>
    %2 = tpu.concatenate %0, %1 in 1 : vector<2x13xf32>, vector<2x115xf32> -> vector<2x128xf32>
    %3 = arith.truncf %2 : vector<2x128xf32> to vector<2x128xbf16>
    %c0_1 = arith.constant 0 : index
    %c0_2 = arith.constant 0 : index
    %4 = vector.load %arg6[%c0_1, %c0_2] : memref<5x128xf32, #tpu.memory_space<vmem>>, vector<1x128xf32>
    %c1 = arith.constant 1 : index
    %c0_3 = arith.constant 0 : index
    %5 = vector.load %arg6[%c1, %c0_3] : memref<5x128xf32, #tpu.memory_space<vmem>>, vector<1x128xf32>
    %c2 = arith.constant 2 : index
    %c0_4 = arith.constant 0 : index
    %6 = vector.load %arg6[%c2, %c0_4] : memref<5x128xf32, #tpu.memory_space<vmem>>, vector<1x128xf32>
    %c3 = arith.constant 3 : index
    %c0_5 = arith.constant 0 : index
    %7 = vector.load %arg6[%c3, %c0_5] : memref<5x128xf32, #tpu.memory_space<vmem>>, vector<1x128xf32>
    %c4 = arith.constant 4 : index
    %c0_6 = arith.constant 0 : index
    %8 = vector.load %arg6[%c4, %c0_6] : memref<5x128xf32, #tpu.memory_space<vmem>>, vector<1x128xf32>
    %c0_7 = arith.constant 0 : index
    %c0_8 = arith.constant 0 : index
    %9 = vector.load %arg7[%c0_7, %c0_8] : memref<3x256xf32, #tpu.memory_space<vmem>>, vector<1x256xf32>
    %c1_9 = arith.constant 1 : index
    %c0_10 = arith.constant 0 : index
    %10 = vector.load %arg7[%c1_9, %c0_10] : memref<3x256xf32, #tpu.memory_space<vmem>>, vector<1x256xf32>
    %c2_11 = arith.constant 2 : index
    %c0_12 = arith.constant 0 : index
    %11 = vector.load %arg7[%c2_11, %c0_12] : memref<3x256xf32, #tpu.memory_space<vmem>>, vector<1x256xf32>
    %c0_13 = arith.constant 0 : index
    %c0_14 = arith.constant 0 : index
    %12 = vector.load %arg2[%c0_13, %c0_14] : memref<128x128xbf16, #tpu.memory_space<vmem>>, vector<128x128xbf16>
    %cst_15 = arith.constant dense<0.000000e+00> : vector<2x128xf32>
    %13 = tpu.matmul %3, %12, %cst_15 {dimension_numbers = #tpu.dot_dimension_numbers<[1], [0], [0], [1], [0, 0, 1, 1], [], []>} : vector<2x128xbf16>, vector<128x128xbf16>, vector<2x128xf32> -> vector<2x128xf32>
    %14 = vector.broadcast %4 : vector<1x128xf32> to vector<2x128xf32>
    %15 = arith.addf %13, %14 : vector<2x128xf32>
    %cst_16 = arith.constant dense<0.000000e+00> : vector<2xf32>
    %16 = vector.multi_reduction <add>, %15, %cst_16 [1] : vector<2x128xf32> to vector<2xf32>
    %17 = vector.shape_cast %16 : vector<2xf32> to vector<2x1xf32>
    %cst_17 = arith.constant 1.280000e+02 : f32
    %18 = vector.broadcast %cst_17 : f32 to vector<2x1xf32>
    %19 = arith.divf %17, %18 : vector<2x1xf32>
    %20 = arith.mulf %15, %15 : vector<2x128xf32>
    %cst_18 = arith.constant dense<0.000000e+00> : vector<2xf32>
    %21 = vector.multi_reduction <add>, %20, %cst_18 [1] : vector<2x128xf32> to vector<2xf32>
    %22 = vector.shape_cast %21 : vector<2xf32> to vector<2x1xf32>
    %cst_19 = arith.constant 1.280000e+02 : f32
    %23 = vector.broadcast %cst_19 : f32 to vector<2x1xf32>
    %24 = arith.divf %22, %23 : vector<2x1xf32>
    %25 = arith.mulf %19, %19 : vector<2x1xf32>
    %26 = arith.subf %24, %25 : vector<2x1xf32>
    %cst_20 = arith.constant 9.99999974E-6 : f32
    %27 = vector.broadcast %cst_20 : f32 to vector<2x1xf32>
    %28 = arith.addf %26, %27 : vector<2x1xf32>
    %29 = math.rsqrt %28 : vector<2x1xf32>
    %30 = vector.broadcast %29 : vector<2x1xf32> to vector<2x128xf32>
    %31 = vector.broadcast %5 : vector<1x128xf32> to vector<2x128xf32>
    %32 = arith.mulf %30, %31 : vector<2x128xf32>
    %33 = vector.broadcast %19 : vector<2x1xf32> to vector<2x128xf32>
    %34 = arith.mulf %33, %32 : vector<2x128xf32>
    %35 = vector.broadcast %6 : vector<1x128xf32> to vector<2x128xf32>
    %36 = arith.subf %35, %34 : vector<2x128xf32>
    %37 = arith.mulf %15, %32 : vector<2x128xf32>
    %38 = arith.addf %37, %36 : vector<2x128xf32>
    %cst_21 = arith.constant 0.000000e+00 : f32
    %39 = vector.broadcast %cst_21 : f32 to vector<2x128xf32>
    %40 = arith.maximumf %38, %39 : vector<2x128xf32>
    %41 = arith.truncf %40 : vector<2x128xf32> to vector<2x128xbf16>
    %c0_22 = arith.constant 0 : index
    %c0_23 = arith.constant 0 : index
    %42 = vector.load %arg3[%c0_22, %c0_23] : memref<128x256xbf16, #tpu.memory_space<vmem>>, vector<128x256xbf16>
    %cst_24 = arith.constant dense<0.000000e+00> : vector<2x256xf32>
    %43 = tpu.matmul %41, %42, %cst_24 {dimension_numbers = #tpu.dot_dimension_numbers<[1], [0], [0], [1], [0, 0, 1, 1], [], []>} : vector<2x128xbf16>, vector<128x256xbf16>, vector<2x256xf32> -> vector<2x256xf32>
    %44 = vector.broadcast %9 : vector<1x256xf32> to vector<2x256xf32>
    %45 = arith.addf %43, %44 : vector<2x256xf32>
    %cst_25 = arith.constant dense<0.000000e+00> : vector<2xf32>
    %46 = vector.multi_reduction <add>, %45, %cst_25 [1] : vector<2x256xf32> to vector<2xf32>
    %47 = vector.shape_cast %46 : vector<2xf32> to vector<2x1xf32>
    %cst_26 = arith.constant 2.560000e+02 : f32
    %48 = vector.broadcast %cst_26 : f32 to vector<2x1xf32>
    %49 = arith.divf %47, %48 : vector<2x1xf32>
    %50 = arith.mulf %45, %45 : vector<2x256xf32>
    %cst_27 = arith.constant dense<0.000000e+00> : vector<2xf32>
    %51 = vector.multi_reduction <add>, %50, %cst_27 [1] : vector<2x256xf32> to vector<2xf32>
    %52 = vector.shape_cast %51 : vector<2xf32> to vector<2x1xf32>
    %cst_28 = arith.constant 2.560000e+02 : f32
    %53 = vector.broadcast %cst_28 : f32 to vector<2x1xf32>
    %54 = arith.divf %52, %53 : vector<2x1xf32>
    %55 = arith.mulf %49, %49 : vector<2x1xf32>
    %56 = arith.subf %54, %55 : vector<2x1xf32>
    %cst_29 = arith.constant 9.99999974E-6 : f32
    %57 = vector.broadcast %cst_29 : f32 to vector<2x1xf32>
    %58 = arith.addf %56, %57 : vector<2x1xf32>
    %59 = math.rsqrt %58 : vector<2x1xf32>
    %60 = vector.broadcast %59 : vector<2x1xf32> to vector<2x256xf32>
    %61 = vector.broadcast %10 : vector<1x256xf32> to vector<2x256xf32>
    %62 = arith.mulf %60, %61 : vector<2x256xf32>
    %63 = vector.broadcast %49 : vector<2x1xf32> to vector<2x256xf32>
    %64 = arith.mulf %63, %62 : vector<2x256xf32>
    %65 = vector.broadcast %11 : vector<1x256xf32> to vector<2x256xf32>
    %66 = arith.subf %65, %64 : vector<2x256xf32>
    %67 = arith.mulf %45, %62 : vector<2x256xf32>
    %68 = arith.addf %67, %66 : vector<2x256xf32>
    %cst_30 = arith.constant 0.000000e+00 : f32
    %69 = vector.broadcast %cst_30 : f32 to vector<2x256xf32>
    %70 = arith.maximumf %68, %69 : vector<2x256xf32>
    %71 = arith.truncf %70 : vector<2x256xf32> to vector<2x256xbf16>
    %c0_31 = arith.constant 0 : index
    %c0_32 = arith.constant 0 : index
    %72 = vector.load %arg4[%c0_31, %c0_32] : memref<256x128xbf16, #tpu.memory_space<vmem>>, vector<256x128xbf16>
    %cst_33 = arith.constant dense<0.000000e+00> : vector<2x128xf32>
    %73 = tpu.matmul %71, %72, %cst_33 {dimension_numbers = #tpu.dot_dimension_numbers<[1], [0], [0], [1], [0, 0, 1, 1], [], []>} : vector<2x256xbf16>, vector<256x128xbf16>, vector<2x128xf32> -> vector<2x128xf32>
    %74 = vector.broadcast %7 : vector<1x128xf32> to vector<2x128xf32>
    %75 = arith.addf %73, %74 : vector<2x128xf32>
    %cst_34 = arith.constant 0.000000e+00 : f32
    %76 = vector.broadcast %cst_34 : f32 to vector<2x128xf32>
    %77 = arith.maximumf %75, %76 : vector<2x128xf32>
    %78 = arith.truncf %77 : vector<2x128xf32> to vector<2x128xbf16>
    %c0_35 = arith.constant 0 : index
    %c0_36 = arith.constant 0 : index
    %79 = vector.load %arg5[%c0_35, %c0_36] : memref<128x128xbf16, #tpu.memory_space<vmem>>, vector<128x128xbf16>
    %cst_37 = arith.constant dense<0.000000e+00> : vector<2x128xf32>
    %80 = tpu.matmul %78, %79, %cst_37 {dimension_numbers = #tpu.dot_dimension_numbers<[1], [0], [0], [1], [0, 0, 1, 1], [], []>} : vector<2x128xbf16>, vector<128x128xbf16>, vector<2x128xf32> -> vector<2x128xf32>
    %81 = vector.broadcast %8 : vector<1x128xf32> to vector<2x128xf32>
    %82 = arith.addf %80, %81 : vector<2x128xf32>
    %83 = vector.extract_strided_slice %82 {offsets = [0, 0], sizes = [2, 21], strides = [1, 1]} : vector<2x128xf32> to vector<2x21xf32>
    %c0_38 = arith.constant 0 : index
    %c0_39 = arith.constant 0 : index
    %84 = vector.load %arg8[%c0_38, %c0_39] : memref<2x21xf32, #tpu.memory_space<vmem>>, vector<2x21xf32>
    tpu.vector_store %arg8[%c0_38, %c0_39], %83 {strides = array<i32>} : memref<2x21xf32, #tpu.memory_space<vmem>>, vector<2x21xf32>,
    return
  }
  func.func @transform_0(%arg0: i32) -> (i32, i32) {
    %c0_i32 = arith.constant 0 : i32
    %c0_i32_0 = arith.constant 0 : i32
    return %arg0, %c0_i32 : i32, i32
  }
  func.func @transform_1(%arg0: i32) -> (i32, i32) {
    %c0_i32 = arith.constant 0 : i32
    %c0_i32_0 = arith.constant 0 : i32
    %c0_i32_1 = arith.constant 0 : i32
    return %c0_i32, %c0_i32_0 : i32, i32
  }
  func.func @transform_2(%arg0: i32) -> (i32, i32) {
    %c0_i32 = arith.constant 0 : i32
    %c0_i32_0 = arith.constant 0 : i32
    %c0_i32_1 = arith.constant 0 : i32
    return %c0_i32, %c0_i32_0 : i32, i32
  }
  func.func @transform_3(%arg0: i32) -> (i32, i32) {
    %c0_i32 = arith.constant 0 : i32
    %c0_i32_0 = arith.constant 0 : i32
    %c0_i32_1 = arith.constant 0 : i32
    return %c0_i32, %c0_i32_0 : i32, i32
  }
  func.func @transform_4(%arg0: i32) -> (i32, i32) {
    %c0_i32 = arith.constant 0 : i32
    %c0_i32_0 = arith.constant 0 : i32
    %c0_i32_1 = arith.constant 0 : i32
    return %c0_i32, %c0_i32_0 : i32, i32
  }
  func.func @transform_5(%arg0: i32) -> (i32, i32) {
    %c0_i32 = arith.constant 0 : i32
    %c0_i32_0 = arith.constant 0 : i32
    %c0_i32_1 = arith.constant 0 : i32
    return %c0_i32, %c0_i32_0 : i32, i32
  }
  func.func @transform_6(%arg0: i32) -> (i32, i32) {
    %c0_i32 = arith.constant 0 : i32
    %c0_i32_0 = arith.constant 0 : i32
    %c0_i32_1 = arith.constant 0 : i32
    return %c0_i32, %c0_i32_0 : i32, i32
  }
  func.func @transform_7(%arg0: i32) -> (i32, i32) {
    %c0_i32 = arith.constant 0 : i32
    %c0_i32_0 = arith.constant 0 : i32
    return %arg0, %c0_i32 : i32, i32
  }
}

</mosaic_0001>

<llo_original>
// kernel: _lambda_.1
$region0: #{_lambda_.1}
  #allocation0 [shape = 'u32[]', space=smem, size = 0x4, offset = 0x4, fixed_abs, tag = 'smem constant byte address 0x4 - core index']
  #allocation1 [shape = 'u32[144,128]{1,0:T(1,128)}', space=vmem, size = 0x12000, scoped, tag = 'internal scratch']
  %s0 = inlined_call_operand.vmem [shape: f32[2,13], index: 0, kind: input, shape index: {}]
  %s1 = inlined_call_operand.vmem [shape: bf16[128,128], index: 1, kind: input, shape index: {}]
  %s2 = inlined_call_operand.vmem [shape: bf16[128,256], index: 2, kind: input, shape index: {}]
  %s3 = inlined_call_operand.vmem [shape: bf16[256,128], index: 3, kind: input, shape index: {}]
  %s4 = inlined_call_operand.vmem [shape: bf16[128,128], index: 4, kind: input, shape index: {}]
  %s5 = inlined_call_operand.hbm [shape: f32[5,128], index: 5, kind: input, shape index: {}]
  %s6 = inlined_call_operand.vmem [shape: f32[3,256], index: 6, kind: input, shape index: {}]
  %s7 = inlined_call_operand.hbm [shape: f32[2,21], index: 7, kind: output, shape index: {}]
  %s8 = sld [smem:[#allocation0]]
  $region42: #{_lambda_.1} parent=0
    _
  %s10 = ssub.s32 1, %s8
  %s11 = scalar_select 0, %s10, %s8
  $region1: #{_lambda_.1} parent=0
    #allocation2 [shape = 'u8[4096]{0}', space=vmem, size = 0x1000, scoped, tag = 'input window, operand 5, single buffered']
    #allocation3 [shape = 's32[1]{0}', space=sflag, size = 0x4, scoped, tag = 'scoped memory for _lambda_.1']
    #allocation4 [shape = 's32[1]{0}', space=sflag, size = 0x4, scoped, tag = 'scoped memory for _lambda_.1']
    #allocation5 [shape = 'u8[1024]{0}', space=vmem, size = 0x400, scoped, tag = 'output window, operand 0, single buffered']
    %12 = vsyncpa [#allocation3], 0
    %13 = vsyncpa [#allocation4], 0
    // Predicated region
    $region2: #{_lambda_.1} parent=1 // pred_check
      _
    $region3: #{_lambda_.1} parent=1 // pred_check_branch
      %15 = sbr.rel (0) target = $region5
    $region4: #{_lambda_.1} parent=1 // pred_region
      _
    $region5: #{_lambda_.1} parent=1 // pred_fallthru
      _
    // Predicated region
    $region6: #{_lambda_.1} parent=1 // pred_check
      _
    $region7: #{_lambda_.1} parent=1 // pred_check_branch
      %17 = sbr.rel (0) target = $region9
    $region8: #{_lambda_.1} parent=1 // pred_region
      _
    $region9: #{_lambda_.1} parent=1 // pred_fallthru
      _
    // Predicated region
    $region10: #{_lambda_.1} parent=1 // pred_check
      _
    $region11: #{_lambda_.1} parent=1 // pred_check_branch
      %19 = sbr.rel (0) target = $region13
    $region12: #{_lambda_.1} parent=1 // pred_region
      _
    $region13: #{_lambda_.1} parent=1 // pred_fallthru
      _
    // Predicated region
    $region14: #{_lambda_.1} parent=1 // pred_check
      _
    $region15: #{_lambda_.1} parent=1 // pred_check_branch
      %21 = sbr.rel (0) target = $region17
    $region16: #{_lambda_.1} parent=1 // pred_region
      _
    $region17: #{_lambda_.1} parent=1 // pred_fallthru
      _
    // Predicated region
    $region18: #{_lambda_.1} parent=1 // pred_check
      _
    $region19: #{_lambda_.1} parent=1 // pred_check_branch
      %23 = sbr.rel (0) target = $region21
    $region20: #{_lambda_.1} parent=1 // pred_region
      _
    $region21: #{_lambda_.1} parent=1 // pred_fallthru
      _
    // Predicated region
    $region22: #{_lambda_.1} parent=1 // pred_check
      _
    $region23: #{_lambda_.1} parent=1 // pred_check_branch
      %25 = sbr.rel (0) target = $region25
    $region24: #{_lambda_.1} parent=1 // pred_region
      %s27 = ssub.s32 128, 128
      %28 = vsyncadd [#allocation3], %s27
      %s30 = sshll.u32 [#allocation2], 4
      %s31 = int_to_ptr.vmem [resolvable:$true] %s30
      %33 = dma.hbm_to_vmem [thread:$0]  %s5, 128, %s31, [#allocation3]
    $region25: #{_lambda_.1} parent=1 // pred_fallthru
      _
    // Predicated region
    $region26: #{_lambda_.1} parent=1 // pred_check
      _
    $region27: #{_lambda_.1} parent=1 // pred_check_branch
      %35 = sbr.rel (0) target = $region29
    $region28: #{_lambda_.1} parent=1 // pred_region
      _
    $region29: #{_lambda_.1} parent=1 // pred_fallthru
      _
    // Predicated region
    $region30: #{_lambda_.1} parent=1 // pred_check
      _
    $region31: #{_lambda_.1} parent=1 // pred_check_branch
      %37 = sbr.rel (0) target = $region33
    $region32: #{_lambda_.1} parent=1 // pred_region
      %38 = dma.done [#allocation3], 128
    $region33: #{_lambda_.1} parent=1 // pred_fallthru
      _
    %v40 = vld [vmem:[%s0] sm:$0x3]
    %vm41 = vcmask 105472
    %v42 = vsel %vm41, %v40, 0.0
    %v43 = vpack.c.bf16 %v42, %v42
    %v44 = vld [vmem:[#allocation2] sm:$0x1]
    %v45 = vld [vmem:[#allocation2 + $0x1] sm:$0x1]
    %v46 = vld [vmem:[#allocation2 + $0x2] sm:$0x1]
    %v47 = vld [vmem:[#allocation2 + $0x3] sm:$0x1]
    %v48 = vld [vmem:[#allocation2 + $0x4] sm:$0x1]
    %v49 = vld [vmem:[%s6] ss:$4 sm:$0x3]
    %s50 = scalar_lea.vmem %s6, 1
    %v51 = vld [vmem:[%s50] ss:$4 sm:$0x3]
    %s52 = scalar_lea.vmem %s6, 2
    %v53 = vld [vmem:[%s52] ss:$4 sm:$0x3]
    %v54 = vld [vmem:[%s1] sm:$0xf]
    %v55 = vld [vmem:[%s1 + $0x4] sm:$0xf]
    %v56 = vld [vmem:[%s1 + $0x8] sm:$0xf]
    %v57 = vld [vmem:[%s1 + $0xc] sm:$0xf]
    %v58 = vld [vmem:[%s1 + $0x10] sm:$0xf]
    %v59 = vld [vmem:[%s1 + $0x14] sm:$0xf]
    %v60 = vld [vmem:[%s1 + $0x18] sm:$0xf]
    %v61 = vld [vmem:[%s1 + $0x1c] sm:$0xf]
    %v62 = vld [vmem:[%s1 + $0x20] sm:$0xf]
    %v63 = vld [vmem:[%s1 + $0x24] sm:$0xf]
    %v64 = vld [vmem:[%s1 + $0x28] sm:$0xf]
    %v65 = vld [vmem:[%s1 + $0x2c] sm:$0xf]
    %v66 = vld [vmem:[%s1 + $0x30] sm:$0xf]
    %v67 = vld [vmem:[%s1 + $0x34] sm:$0xf]
    %v68 = vld [vmem:[%s1 + $0x38] sm:$0xf]
    %v69 = vld [vmem:[%s1 + $0x3c] sm:$0xf]
    %v70 = vlaneseq
    %v71 = vshrl.u32 %v70, 7
    %v72 = vsub.s32 0, %v71
    %v73 = vrot.slane %v44, %v72
    %v90 = vunpack.c.l.b16 %v54
    %v91 = vunpack.c.l.b16 %v55
    %v92 = vunpack.c.l.b16 %v56
    %v93 = vunpack.c.l.b16 %v57
    %v94 = vunpack.c.l.b16 %v58
    %v95 = vunpack.c.l.b16 %v59
    %v96 = vunpack.c.l.b16 %v60
    %v97 = vunpack.c.l.b16 %v61
    %v98 = vunpack.c.l.b16 %v62
    %v99 = vunpack.c.l.b16 %v63
    %v100 = vunpack.c.l.b16 %v64
    %v101 = vunpack.c.l.b16 %v65
    %v102 = vunpack.c.l.b16 %v66
    %v103 = vunpack.c.l.b16 %v67
    %v104 = vunpack.c.l.b16 %v68
    %v105 = vunpack.c.l.b16 %v69
    %v106 = vpack.c.b16 %v91, %v90
    %v107 = vpack.c.b16 %v93, %v92
    %v108 = vpack.c.b16 %v95, %v94
    %v109 = vpack.c.b16 %v97, %v96
    %v110 = vpack.c.b16 %v99, %v98
    %v111 = vpack.c.b16 %v101, %v100
    %v112 = vpack.c.b16 %v103, %v102
    %v113 = vpack.c.b16 %v105, %v104
    %122 = vmatprep.subr.bf16.mxu0 0
    %123 = vmatpush1.bf16.msra.mxu0 %v106
    %124 = vmatprep.subr.bf16.mxu0 0
    %125 = vmatpush1.bf16.msra.mxu0 %v107
    %126 = vmatprep.subr.bf16.mxu0 0
    %127 = vmatpush1.bf16.msra.mxu0 %v108
    %128 = vmatprep.subr.bf16.mxu0 0
    %129 = vmatpush1.bf16.msra.mxu0 %v109
    %130 = vmatprep.subr.bf16.mxu0 0
    %131 = vmatpush1.bf16.msra.mxu0 %v110
    %132 = vmatprep.subr.bf16.mxu0 0
    %133 = vmatpush1.bf16.msra.mxu0 %v111
    %134 = vmatprep.subr.bf16.mxu0 0
    %135 = vmatpush1.bf16.msra.mxu0 %v112
    %136 = vmatprep.subr.bf16.mxu0 0
    %137 = vmatpush1.bf16.msra.mxu0 %v113
    %138 = vmatprep.subr.bf16.mxu0 0
    %139 = vmatpush1.bf16.msra.mxu0 0
    %140 = vmatprep.subr.bf16.mxu0 0
    %141 = vmatpush1.bf16.msra.mxu0 0
    %142 = vmatprep.subr.bf16.mxu0 0
    %143 = vmatpush1.bf16.msra.mxu0 0
    %144 = vmatprep.subr.bf16.mxu0 0
    %145 = vmatpush1.bf16.msra.mxu0 0
    %146 = vmatprep.subr.bf16.mxu0 0
    %147 = vmatpush1.bf16.msra.mxu0 0
    %148 = vmatprep.subr.bf16.mxu0 0
    %149 = vmatpush1.bf16.msra.mxu0 0
    %150 = vmatprep.subr.bf16.mxu0 0
    %151 = vmatpush1.bf16.msra.mxu0 0
    %152 = vmatprep.subr.bf16.mxu0 0
    %153 = vmatpush1.bf16.msra.mxu0 0
    %154 = vmatprep.mubr.bf16.mxu0 0
    %155 = vmatmul.mubr.bf16.gmra.mrb[0].mxu0 %v43
    %v156 = vpop.f32.mrb[0].mxu0
    %v157 = vadd.f32 %v73, %v156
    %v158 = vpop.f32.mrb[0].mxu0
    %v159 = vpop.f32.mrb[0].mxu0
    %v160 = vpop.f32.mrb[0].mxu0
    %161 = vdwg.mxu0
    %vm162 = vcmask 1041408
    %v163 = vsel %vm162, %v157, 0.0
    %164 = vadd.xlane.f32.xlu0 %v163
    %v165 = vpop.xlane.xlu0 %164
    %v166 = vrcp.pop 128.0
    %v167 = vmul.f32 %v165, %v166
    %v168 = vmul.f32 %v157, %v157
    %v169 = vsel %vm162, %v168, 0.0
    %170 = vadd.xlane.f32.xlu0 %v169
    %v171 = vpop.xlane.xlu0 %170
    %v172 = vmul.f32 %v171, %v166
    %v173 = vmul.f32 %v167, %v167
    %v174 = vsub.f32 %v172, %v173
    %v175 = vadd.f32 %v174, 1e-05
    %v176 = vrsqrt.pop %v175
    %v177 = vlaneseq
    %v178 = vshrl.u32 %v177, 7
    %v179 = vsub.s32 0, %v178
    %v180 = vrot.slane %v45, %v179
    %v181 = vmul.f32 %v176, %v180
    %v182 = vmul.f32 %v167, %v181
    %v183 = vlaneseq
    %v184 = vshrl.u32 %v183, 7
    %v185 = vsub.s32 0, %v184
    %v186 = vrot.slane %v46, %v185
    %v187 = vsub.f32 %v186, %v182
    %v188 = vmul.f32 %v157, %v181
    %v189 = vadd.f32 %v188, %v187
    %v190 = vmax.f32 %v189, 0.0
    %v191 = vpack.c.bf16 %v190, %v190
    %v192 = vld [vmem:[%s2] sm:$0xff]
    %v193 = vld [vmem:[%s2 + $0x8] sm:$0xff]
    %v194 = vld [vmem:[%s2 + $0x10] sm:$0xff]
    %v195 = vld [vmem:[%s2 + $0x18] sm:$0xff]
    %v196 = vld [vmem:[%s2 + $0x20] sm:$0xff]
    %v197 = vld [vmem:[%s2 + $0x28] sm:$0xff]
    %v198 = vld [vmem:[%s2 + $0x30] sm:$0xff]
    %v199 = vld [vmem:[%s2 + $0x38] sm:$0xff]
    %v200 = vld [vmem:[%s2 + $0x40] sm:$0xff]
    %v201 = vld [vmem:[%s2 + $0x48] sm:$0xff]
    %v202 = vld [vmem:[%s2 + $0x50] sm:$0xff]
    %v203 = vld [vmem:[%s2 + $0x58] sm:$0xff]
    %v204 = vld [vmem:[%s2 + $0x60] sm:$0xff]
    %v205 = vld [vmem:[%s2 + $0x68] sm:$0xff]
    %v206 = vld [vmem:[%s2 + $0x70] sm:$0xff]
    %v207 = vld [vmem:[%s2 + $0x78] sm:$0xff]
    %v209 = vlaneseq
    %v210 = vshrl.u32 %v209, 7
    %v211 = vsub.s32 0, %v210
    %v212 = vrot.slane %v49, %v211
    %v213 = vlaneseq
    %v214 = vshrl.u32 %v213, 7
    %v215 = vsub.s32 1, %v214
    %v216 = vrot.slane %v49, %v215
    %v235 = vunpack.c.l.b16 %v192
    %v236 = vunpack.c.h.b16 %v192
    %v237 = vunpack.c.l.b16 %v193
    %v238 = vunpack.c.h.b16 %v193
    %v239 = vunpack.c.l.b16 %v194
    %v240 = vunpack.c.h.b16 %v194
    %v241 = vunpack.c.l.b16 %v195
    %v242 = vunpack.c.h.b16 %v195
    %v243 = vunpack.c.l.b16 %v196
    %v244 = vunpack.c.h.b16 %v196
    %v245 = vunpack.c.l.b16 %v197
    %v246 = vunpack.c.h.b16 %v197
    %v247 = vunpack.c.l.b16 %v198
    %v248 = vunpack.c.h.b16 %v198
    %v249 = vunpack.c.l.b16 %v199
    %v250 = vunpack.c.h.b16 %v199
    %v251 = vunpack.c.l.b16 %v200
    %v252 = vunpack.c.h.b16 %v200
    %v253 = vunpack.c.l.b16 %v201
    %v254 = vunpack.c.h.b16 %v201
    %v255 = vunpack.c.l.b16 %v202
    %v256 = vunpack.c.h.b16 %v202
    %v257 = vunpack.c.l.b16 %v203
    %v258 = vunpack.c.h.b16 %v203
    %v259 = vunpack.c.l.b16 %v204
    %v260 = vunpack.c.h.b16 %v204
    %v261 = vunpack.c.l.b16 %v205
    %v262 = vunpack.c.h.b16 %v205
    %v263 = vunpack.c.l.b16 %v206
    %v264 = vunpack.c.h.b16 %v206
    %v265 = vunpack.c.l.b16 %v207
    %v266 = vunpack.c.h.b16 %v207
    %v267 = vpack.c.b16 %v237, %v235
    %v268 = vpack.c.b16 %v238, %v236
    %v269 = vpack.c.b16 %v241, %v239
    %v270 = vpack.c.b16 %v242, %v240
    %v271 = vpack.c.b16 %v245, %v243
    %v272 = vpack.c.b16 %v246, %v244
    %v273 = vpack.c.b16 %v249, %v247
    %v274 = vpack.c.b16 %v250, %v248
    %v275 = vpack.c.b16 %v253, %v251
    %v276 = vpack.c.b16 %v254, %v252
    %v277 = vpack.c.b16 %v257, %v255
    %v278 = vpack.c.b16 %v258, %v256
    %v279 = vpack.c.b16 %v261, %v259
    %v280 = vpack.c.b16 %v262, %v260
    %v281 = vpack.c.b16 %v265, %v263
    %v282 = vpack.c.b16 %v266, %v264
    %299 = vmatprep.subr.bf16.mxu0 %v268
    %300 = vmatpush1.bf16.msra.mxu0 %v267
    %301 = vmatprep.subr.bf16.mxu0 %v270
    %302 = vmatpush1.bf16.msra.mxu0 %v269
    %303 = vmatprep.subr.bf16.mxu0 %v272
    %304 = vmatpush1.bf16.msra.mxu0 %v271
    %305 = vmatprep.subr.bf16.mxu0 %v274
    %306 = vmatpush1.bf16.msra.mxu0 %v273
    %307 = vmatprep.subr.bf16.mxu0 %v276
    %308 = vmatpush1.bf16.msra.mxu0 %v275
    %309 = vmatprep.subr.bf16.mxu0 %v278
    %310 = vmatpush1.bf16.msra.mxu0 %v277
    %311 = vmatprep.subr.bf16.mxu0 %v280
    %312 = vmatpush1.bf16.msra.mxu0 %v279
    %313 = vmatprep.subr.bf16.mxu0 %v282
    %314 = vmatpush1.bf16.msra.mxu0 %v281
    %315 = vmatprep.subr.bf16.mxu0 0
    %316 = vmatpush1.bf16.msra.mxu0 0
    %317 = vmatprep.subr.bf16.mxu0 0
    %318 = vmatpush1.bf16.msra.mxu0 0
    %319 = vmatprep.subr.bf16.mxu0 0
    %320 = vmatpush1.bf16.msra.mxu0 0
    %321 = vmatprep.subr.bf16.mxu0 0
    %322 = vmatpush1.bf16.msra.mxu0 0
    %323 = vmatprep.subr.bf16.mxu0 0
    %324 = vmatpush1.bf16.msra.mxu0 0
    %325 = vmatprep.subr.bf16.mxu0 0
    %326 = vmatpush1.bf16.msra.mxu0 0
    %327 = vmatprep.subr.bf16.mxu0 0
    %328 = vmatpush1.bf16.msra.mxu0 0
    %329 = vmatprep.subr.bf16.mxu0 0
    %330 = vmatpush1.bf16.msra.mxu0 0
    %331 = vmatprep.mubr.bf16.mxu0 0
    %332 = vmatmul.mubr.bf16.gmra.mrb[0].mxu0 %v191
    %v333 = vpop.f32.mrb[0].mxu0
    %v334 = vadd.f32 %v212, %v333
    %v335 = vpop.f32.mrb[0].mxu0
    %v336 = vadd.f32 %v216, %v335
    %v337 = vpop.f32.mrb[0].mxu0
    %v338 = vpop.f32.mrb[0].mxu0
    %339 = vdwg.mxu0
    %v340 = vsel %vm162, %v334, 0.0
    %v341 = vsel %vm162, %v336, 0.0
    %v342 = vadd.f32 %v340, %v341
    %343 = vadd.xlane.f32.xlu0 %v342
    %v344 = vpop.xlane.xlu0 %343
    %v345 = vrcp.pop 256.0
    %v346 = vmul.f32 %v344, %v345
    %v347 = vmul.f32 %v334, %v334
    %v348 = vmul.f32 %v336, %v336
    %v349 = vsel %vm162, %v347, 0.0
    %v350 = vsel %vm162, %v348, 0.0
    %v351 = vadd.f32 %v349, %v350
    %352 = vadd.xlane.f32.xlu0 %v351
    %v353 = vpop.xlane.xlu0 %352
    %v354 = vmul.f32 %v353, %v345
    %v355 = vmul.f32 %v346, %v346
    %v356 = vsub.f32 %v354, %v355
    %v357 = vadd.f32 %v356, 1e-05
    %v358 = vrsqrt.pop %v357
    %v360 = vlaneseq
    %v361 = vshrl.u32 %v360, 7
    %v362 = vsub.s32 0, %v361
    %v363 = vrot.slane %v51, %v362
    %v364 = vlaneseq
    %v365 = vshrl.u32 %v364, 7
    %v366 = vsub.s32 1, %v365
    %v367 = vrot.slane %v51, %v366
    %v370 = vmul.f32 %v358, %v363
    %v371 = vmul.f32 %v358, %v367
    %v372 = vmul.f32 %v346, %v370
    %v373 = vmul.f32 %v346, %v371
    %v375 = vlaneseq
    %v376 = vshrl.u32 %v375, 7
    %v377 = vsub.s32 0, %v376
    %v378 = vrot.slane %v53, %v377
    %v379 = vlaneseq
    %v380 = vshrl.u32 %v379, 7
    %v381 = vsub.s32 1, %v380
    %v382 = vrot.slane %v53, %v381
    %v385 = vsub.f32 %v378, %v372
    %v386 = vsub.f32 %v382, %v373
    %v387 = vmul.f32 %v334, %v370
    %v388 = vmul.f32 %v336, %v371
    %v389 = vadd.f32 %v387, %v385
    %v390 = vadd.f32 %v388, %v386
    %v391 = vmax.f32 %v389, 0.0
    %v392 = vmax.f32 %v390, 0.0
    %v393 = vpack.c.bf16 %v391, %v391
    %v394 = vpack.c.bf16 %v392, %v392
    %v395 = vld [vmem:[%s3] sm:$0xf]
    %v396 = vld [vmem:[%s3 + $0x4] sm:$0xf]
    %v397 = vld [vmem:[%s3 + $0x8] sm:$0xf]
    %v398 = vld [vmem:[%s3 + $0xc] sm:$0xf]
    %v399 = vld [vmem:[%s3 + $0x10] sm:$0xf]
    %v400 = vld [vmem:[%s3 + $0x14] sm:$0xf]
    %v401 = vld [vmem:[%s3 + $0x18] sm:$0xf]
    %v402 = vld [vmem:[%s3 + $0x1c] sm:$0xf]
    %v403 = vld [vmem:[%s3 + $0x20] sm:$0xf]
    %v404 = vld [vmem:[%s3 + $0x24] sm:$0xf]
    %v405 = vld [vmem:[%s3 + $0x28] sm:$0xf]
    %v406 = vld [vmem:[%s3 + $0x2c] sm:$0xf]
    %v407 = vld [vmem:[%s3 + $0x30] sm:$0xf]
    %v408 = vld [vmem:[%s3 + $0x34] sm:$0xf]
    %v409 = vld [vmem:[%s3 + $0x38] sm:$0xf]
    %v410 = vld [vmem:[%s3 + $0x3c] sm:$0xf]
    %v411 = vld [vmem:[%s3 + $0x40] sm:$0xf]
    %v412 = vld [vmem:[%s3 + $0x44] sm:$0xf]
    %v413 = vld [vmem:[%s3 + $0x48] sm:$0xf]
    %v414 = vld [vmem:[%s3 + $0x4c] sm:$0xf]
    %v415 = vld [vmem:[%s3 + $0x50] sm:$0xf]
    %v416 = vld [vmem:[%s3 + $0x54] sm:$0xf]
    %v417 = vld [vmem:[%s3 + $0x58] sm:$0xf]
    %v418 = vld [vmem:[%s3 + $0x5c] sm:$0xf]
    %v419 = vld [vmem:[%s3 + $0x60] sm:$0xf]
    %v420 = vld [vmem:[%s3 + $0x64] sm:$0xf]
    %v421 = vld [vmem:[%s3 + $0x68] sm:$0xf]
    %v422 = vld [vmem:[%s3 + $0x6c] sm:$0xf]
    %v423 = vld [vmem:[%s3 + $0x70] sm:$0xf]
    %v424 = vld [vmem:[%s3 + $0x74] sm:$0xf]
    %v425 = vld [vmem:[%s3 + $0x78] sm:$0xf]
    %v426 = vld [vmem:[%s3 + $0x7c] sm:$0xf]
    %v427 = vlaneseq
    %v428 = vshrl.u32 %v427, 7
    %v429 = vsub.s32 0, %v428
    %v430 = vrot.slane %v47, %v429
    %v463 = vunpack.c.l.b16 %v395
    %v464 = vunpack.c.l.b16 %v396
    %v465 = vunpack.c.l.b16 %v397
    %v466 = vunpack.c.l.b16 %v398
    %v467 = vunpack.c.l.b16 %v399
    %v468 = vunpack.c.l.b16 %v400
    %v469 = vunpack.c.l.b16 %v401
    %v470 = vunpack.c.l.b16 %v402
    %v471 = vunpack.c.l.b16 %v403
    %v472 = vunpack.c.l.b16 %v404
    %v473 = vunpack.c.l.b16 %v405
    %v474 = vunpack.c.l.b16 %v406
    %v475 = vunpack.c.l.b16 %v407
    %v476 = vunpack.c.l.b16 %v408
    %v477 = vunpack.c.l.b16 %v409
    %v478 = vunpack.c.l.b16 %v410
    %v479 = vunpack.c.l.b16 %v411
    %v480 = vunpack.c.l.b16 %v412
    %v481 = vunpack.c.l.b16 %v413
    %v482 = vunpack.c.l.b16 %v414
    %v483 = vunpack.c.l.b16 %v415
    %v484 = vunpack.c.l.b16 %v416
    %v485 = vunpack.c.l.b16 %v417
    %v486 = vunpack.c.l.b16 %v418
    %v487 = vunpack.c.l.b16 %v419
    %v488 = vunpack.c.l.b16 %v420
    %v489 = vunpack.c.l.b16 %v421
    %v490 = vunpack.c.l.b16 %v422
    %v491 = vunpack.c.l.b16 %v423
    %v492 = vunpack.c.l.b16 %v424
    %v493 = vunpack.c.l.b16 %v425
    %v494 = vunpack.c.l.b16 %v426
    %v495 = vpack.c.b16 %v464, %v463
    %v496 = vpack.c.b16 %v466, %v465
    %v497 = vpack.c.b16 %v468, %v467
    %v498 = vpack.c.b16 %v470, %v469
    %v499 = vpack.c.b16 %v472, %v471
    %v500 = vpack.c.b16 %v474, %v473
    %v501 = vpack.c.b16 %v476, %v475
    %v502 = vpack.c.b16 %v478, %v477
    %v503 = vpack.c.b16 %v480, %v479
    %v504 = vpack.c.b16 %v482, %v481
    %v505 = vpack.c.b16 %v484, %v483
    %v506 = vpack.c.b16 %v486, %v485
    %v507 = vpack.c.b16 %v488, %v487
    %v508 = vpack.c.b16 %v490, %v489
    %v509 = vpack.c.b16 %v492, %v491
    %v510 = vpack.c.b16 %v494, %v493
    %527 = vmatprep.subr.bf16.mxu0 0
    %528 = vmatpush1.bf16.msra.mxu0 %v495
    %529 = vmatprep.subr.bf16.mxu0 0
    %530 = vmatpush1.bf16.msra.mxu0 %v496
    %531 = vmatprep.subr.bf16.mxu0 0
    %532 = vmatpush1.bf16.msra.mxu0 %v497
    %533 = vmatprep.subr.bf16.mxu0 0
    %534 = vmatpush1.bf16.msra.mxu0 %v498
    %535 = vmatprep.subr.bf16.mxu0 0
    %536 = vmatpush1.bf16.msra.mxu0 %v499
    %537 = vmatprep.subr.bf16.mxu0 0
    %538 = vmatpush1.bf16.msra.mxu0 %v500
    %539 = vmatprep.subr.bf16.mxu0 0
    %540 = vmatpush1.bf16.msra.mxu0 %v501
    %541 = vmatprep.subr.bf16.mxu0 0
    %542 = vmatpush1.bf16.msra.mxu0 %v502
    %543 = vmatprep.subr.bf16.mxu0 0
    %544 = vmatpush1.bf16.msra.mxu0 %v503
    %545 = vmatprep.subr.bf16.mxu0 0
    %546 = vmatpush1.bf16.msra.mxu0 %v504
    %547 = vmatprep.subr.bf16.mxu0 0
    %548 = vmatpush1.bf16.msra.mxu0 %v505
    %549 = vmatprep.subr.bf16.mxu0 0
    %550 = vmatpush1.bf16.msra.mxu0 %v506
    %551 = vmatprep.subr.bf16.mxu0 0
    %552 = vmatpush1.bf16.msra.mxu0 %v507
    %553 = vmatprep.subr.bf16.mxu0 0
    %554 = vmatpush1.bf16.msra.mxu0 %v508
    %555 = vmatprep.subr.bf16.mxu0 0
    %556 = vmatpush1.bf16.msra.mxu0 %v509
    %557 = vmatprep.subr.bf16.mxu0 0
    %558 = vmatpush1.bf16.msra.mxu0 %v510
    %559 = vmatprep.mubr.bf16.mxu0 %v394
    %560 = vmatmul.mubr.bf16.gmra.mrb[0].mxu0 %v393
    %v561 = vpop.f32.mrb[0].mxu0
    %v562 = vadd.f32 %v430, %v561
    %v563 = vpop.f32.mrb[0].mxu0
    %v564 = vpop.f32.mrb[0].mxu0
    %v565 = vpop.f32.mrb[0].mxu0
    %566 = vdwg.mxu0
    %v567 = vmax.f32 %v562, 0.0
    %v568 = vpack.c.bf16 %v567, %v567
    %v569 = vld [vmem:[%s4] sm:$0xf]
    %v570 = vld [vmem:[%s4 + $0x4] sm:$0xf]
    %v571 = vld [vmem:[%s4 + $0x8] sm:$0xf]
    %v572 = vld [vmem:[%s4 + $0xc] sm:$0xf]
    %v573 = vld [vmem:[%s4 + $0x10] sm:$0xf]
    %v574 = vld [vmem:[%s4 + $0x14] sm:$0xf]
    %v575 = vld [vmem:[%s4 + $0x18] sm:$0xf]
    %v576 = vld [vmem:[%s4 + $0x1c] sm:$0xf]
    %v577 = vld [vmem:[%s4 + $0x20] sm:$0xf]
    %v578 = vld [vmem:[%s4 + $0x24] sm:$0xf]
    %v579 = vld [vmem:[%s4 + $0x28] sm:$0xf]
    %v580 = vld [vmem:[%s4 + $0x2c] sm:$0xf]
    %v581 = vld [vmem:[%s4 + $0x30] sm:$0xf]
    %v582 = vld [vmem:[%s4 + $0x34] sm:$0xf]
    %v583 = vld [vmem:[%s4 + $0x38] sm:$0xf]
    %v584 = vld [vmem:[%s4 + $0x3c] sm:$0xf]
    %v585 = vlaneseq
    %v586 = vshrl.u32 %v585, 7
    %v587 = vsub.s32 0, %v586
    %v588 = vrot.slane %v48, %v587
    %v605 = vunpack.c.l.b16 %v569
    %v606 = vunpack.c.l.b16 %v570
    %v607 = vunpack.c.l.b16 %v571
    %v608 = vunpack.c.l.b16 %v572
    %v609 = vunpack.c.l.b16 %v573
    %v610 = vunpack.c.l.b16 %v574
    %v611 = vunpack.c.l.b16 %v575
    %v612 = vunpack.c.l.b16 %v576
    %v613 = vunpack.c.l.b16 %v577
    %v614 = vunpack.c.l.b16 %v578
    %v615 = vunpack.c.l.b16 %v579
    %v616 = vunpack.c.l.b16 %v580
    %v617 = vunpack.c.l.b16 %v581
    %v618 = vunpack.c.l.b16 %v582
    %v619 = vunpack.c.l.b16 %v583
    %v620 = vunpack.c.l.b16 %v584
    %v621 = vpack.c.b16 %v606, %v605
    %v622 = vpack.c.b16 %v608, %v607
    %v623 = vpack.c.b16 %v610, %v609
    %v624 = vpack.c.b16 %v612, %v611
    %v625 = vpack.c.b16 %v614, %v613
    %v626 = vpack.c.b16 %v616, %v615
    %v627 = vpack.c.b16 %v618, %v617
    %v628 = vpack.c.b16 %v620, %v619
    %637 = vmatprep.subr.bf16.mxu0 0
    %638 = vmatpush1.bf16.msra.mxu0 %v621
    %639 = vmatprep.subr.bf16.mxu0 0
    %640 = vmatpush1.bf16.msra.mxu0 %v622
    %641 = vmatprep.subr.bf16.mxu0 0
    %642 = vmatpush1.bf16.msra.mxu0 %v623
    %643 = vmatprep.subr.bf16.mxu0 0
    %644 = vmatpush1.bf16.msra.mxu0 %v624
    %645 = vmatprep.subr.bf16.mxu0 0
    %646 = vmatpush1.bf16.msra.mxu0 %v625
    %647 = vmatprep.subr.bf16.mxu0 0
    %648 = vmatpush1.bf16.msra.mxu0 %v626
    %649 = vmatprep.subr.bf16.mxu0 0
    %650 = vmatpush1.bf16.msra.mxu0 %v627
    %651 = vmatprep.subr.bf16.mxu0 0
    %652 = vmatpush1.bf16.msra.mxu0 %v628
    %653 = vmatprep.subr.bf16.mxu0 0
    %654 = vmatpush1.bf16.msra.mxu0 0
    %655 = vmatprep.subr.bf16.mxu0 0
    %656 = vmatpush1.bf16.msra.mxu0 0
    %657 = vmatprep.subr.bf16.mxu0 0
    %658 = vmatpush1.bf16.msra.mxu0 0
    %659 = vmatprep.subr.bf16.mxu0 0
    %660 = vmatpush1.bf16.msra.mxu0 0
    %661 = vmatprep.subr.bf16.mxu0 0
    %662 = vmatpush1.bf16.msra.mxu0 0
    %663 = vmatprep.subr.bf16.mxu0 0
    %664 = vmatpush1.bf16.msra.mxu0 0
    %665 = vmatprep.subr.bf16.mxu0 0
    %666 = vmatpush1.bf16.msra.mxu0 0
    %667 = vmatprep.subr.bf16.mxu0 0
    %668 = vmatpush1.bf16.msra.mxu0 0
    %669 = vmatprep.mubr.bf16.mxu0 0
    %670 = vmatmul.mubr.bf16.gmra.mrb[0].mxu0 %v568
    %v671 = vpop.f32.mrb[0].mxu0
    %v672 = vadd.f32 %v588, %v671
    %v673 = vpop.f32.mrb[0].mxu0
    %v674 = vpop.f32.mrb[0].mxu0
    %v675 = vpop.f32.mrb[0].mxu0
    %676 = vdwg.mxu0
    %vm677 = vcmask 164864
    %678 = vst.msk [vmem:[#allocation5] sm:$0x3] %vm677, %v672
    // Predicated region
    $region34: #{_lambda_.1} parent=1 // pred_check
      _
    $region35: #{_lambda_.1} parent=1 // pred_check_branch
      %680 = sbr.rel (0) target = $region37
    $region36: #{_lambda_.1} parent=1 // pred_region
      %s682 = ssub.s32 32, 32
      %683 = vsyncadd [#allocation4], %s682
      %s685 = sshll.u32 [#allocation5], 4
      %s686 = int_to_ptr.vmem [resolvable:$true] %s685
      %688 = dma.vmem_to_hbm [thread:$0]  %s686, 32, %s7, [#allocation4]
    $region37: #{_lambda_.1} parent=1 // pred_fallthru
      _
    // Predicated region
    $region38: #{_lambda_.1} parent=1 // pred_check
      _
    $region39: #{_lambda_.1} parent=1 // pred_check_branch
      %690 = sbr.rel (0) target = $region41
    $region40: #{_lambda_.1} parent=1 // pred_region
      %691 = dma.done [#allocation4], 32
    $region41: #{_lambda_.1} parent=1 // pred_fallthru
      _
    %692 = vsyncpa [#allocation3], 1
    %693 = vsyncpa [#allocation4], 1

</llo_original>
